<compile_context>
chip_gen: v5e
topology: v5e:2x2
jax: 0.10.0
libtpu: 0.0.40
codegen_flags: <defaults>
</compile_context>

<pallas_src>
import functools

import jax
import jax.numpy as jnp
from jax import lax
from jax.experimental import pallas as pl
from jax.experimental.pallas import tpu as pltpu


def _focal_loss_kernel(logits_ref, targets_ref, out_ref, *,
                       alpha, gamma, n, tile_n, tiles_per_split):
    # logits_ref: (tile_n, C) native dtype, targets_ref: (tile_n, 1) int32,
    # out_ref: (1, 1) f32 accumulator resident across the inner (batch) axis.
    split = pl.program_id(0)       # "parallel" axis (TensorCore split on v7x)
    i = pl.program_id(1)           # "arbitrary" reduction axis (batch tiles)

    @pl.when(i == 0)
    def _init():
        out_ref[...] = jnp.zeros_like(out_ref)

    x = logits_ref[...].astype(jnp.float32)            # (tile_n, C)
    t = targets_ref[...]                               # (tile_n, 1) int32

    # Numerically-stable log-sum-exp pieces; no full logp materialization.
    m = jnp.max(x, axis=-1, keepdims=True)             # (tile_n, 1)
    z = x - m
    exp_z = jnp.exp(z)                                 # only full-tile transcendental
    sumexp = jnp.sum(exp_z, axis=-1, keepdims=True)    # (tile_n, 1)

    # Gather z[target] per row via iota==target select (single full-tile pass).
    cols = lax.broadcasted_iota(jnp.int32, x.shape, 1)
    target_z = jnp.sum(jnp.where(cols == t, z, 0.0), axis=-1, keepdims=True)

    # ce = log(sumexp) - z[target]  (keep this form: -log(exp_z[t]/sumexp) can
    # hit inf when exp_z[t] underflows).  pt = exp(-ce) is per-row EUP work and
    # guarantees pt <= 1 (no approx reciprocal, no second full-tile pass).
    ce = jnp.log(sumexp) - target_z                    # (tile_n, 1), >= 0
    pt = jnp.exp(-ce)                                  # (tile_n, 1)
    omp = jnp.maximum(1.0 - pt, 0.0)                   # guard fp rounding

    g = float(gamma)
    if g == 2.0:
        w = omp * omp                                  # one VPU mul, no pow
    elif g.is_integer() and g >= 0.0:
        w = lax.integer_pow(omp, int(g))
    else:
        w = omp ** g                                   # base clamped >= 0

    focal = (alpha * w) * ce                           # (tile_n, 1)

    # Mask padded rows of the ragged last tile AND fully-masked duplicate tiles
    # (the index_map clamps out-of-range tile indices to the last real tile).
    # Keep this a true select: garbage rows may hold NaN/inf.
    tile_idx = split * tiles_per_split + i
    rows = lax.broadcasted_iota(jnp.int32, (tile_n, 1), 0) + tile_idx * tile_n
    valid = rows < n
    out_ref[...] += jnp.sum(jnp.where(valid, focal, 0.0), keepdims=True)


def _vmem_budget():
    """Per-generation (target f32 block bytes, scoped vmem_limit_bytes)."""
    try:
        kind = jax.devices()[0].device_kind.lower()
    except Exception:  # pragma: no cover - defensive
        kind = ""
    if "v7" in kind:
        # 64 MiB physical VMEM: 2x ~6 MiB double-buffered logits + ~4 tile-sized
        # f32 temporaries stays well under a 44 MiB scoped limit.
        return 6 << 20, 44 << 20
    if "v6" in kind:
        # 128 MiB VMEM: big blocks amortize the ~0.35 us/step overhead.
        return 10 << 20, 80 << 20
    if "v5" in kind and ("lite" in kind or "v5e" in kind):
        # 16 MiB default scoped VMEM; keep blocks modest and raise the limit.
        return 3 << 20, 48 << 20
    return 4 << 20, 48 << 20


def _choose_tile_n(n, c, target_bytes):
    """Byte-capped batch tile (multiple of 8 rows); no arbitrary row cap."""
    rows = max(8, (target_bytes // max(1, c * 4)) // 8 * 8)   # f32 footprint
    return n if n <= rows else rows


def focal_loss(logits, targets, alpha=1.0, gamma=2.0, *, tile_n=None):
    """Focal loss, reduction='mean'.

    logits: (N, C) float (f32/bf16/f16 — read in native dtype, upcast in-kernel).
    targets: (N,) integer class indices (assumed valid, like CE targets).
    """
    n, c = logits.shape
    target_bytes, vmem_limit = _vmem_budget()

    if tile_n is None:
        tile_n = _choose_tile_n(n, c, target_bytes)
    tile_n = int(tile_n)
    if tile_n >= n:
        tile_n = n                                     # full-extent block
    else:
        tile_n = max(8, (tile_n // 8) * 8)             # (8, 128) block rule

    total_tiles = -(-n // tile_n)
    num_splits = 2 if total_tiles >= 2 else 1          # 2 TCs on v7x; harmless elsewhere
    tiles_per_split = -(-total_tiles // num_splits)

    targets2d = targets.astype(jnp.int32).reshape(n, 1)

    kernel = functools.partial(
        _focal_loss_kernel,
        alpha=float(alpha), gamma=float(gamma),
        n=n, tile_n=tile_n, tiles_per_split=tiles_per_split,
    )

    def in_map(split, i):
        # Clamp out-of-range tiles of the (possibly uneven) split to the last
        # real tile; the kernel masks those rows out via the global row index.
        return (jnp.minimum(split * tiles_per_split + i, total_tiles - 1), 0)

    itemsize = jnp.dtype(logits.dtype).itemsize
    cost = pl.CostEstimate(
        flops=8 * n * c,
        transcendentals=n * c + 2 * n,
        bytes_accessed=n * c * itemsize + n * 4 + num_splits * 4,
    )

    partial_sums = pl.pallas_call(
        kernel,
        out_shape=jax.ShapeDtypeStruct((num_splits, 1), jnp.float32),
        grid_spec=pltpu.PrefetchScalarGridSpec(
            num_scalar_prefetch=0,
            grid=(num_splits, tiles_per_split),
            in_specs=[
                pl.BlockSpec((tile_n, c), in_map),      # streamed logits tile
                pl.BlockSpec((tile_n, 1), in_map),      # matching targets tile
            ],
            out_specs=pl.BlockSpec((1, 1), lambda s, i: (s, 0)),  # per-split acc
        ),
        compiler_params=pltpu.CompilerParams(
            dimension_semantics=("parallel", "arbitrary"),
            vmem_limit_bytes=vmem_limit,
        ),
        cost_estimate=cost,
    )(logits, targets2d)

    return jnp.sum(partial_sums) / jnp.float32(n)       # reduction='mean'


def _focal_loss_ref(logits, targets, alpha=1.0, gamma=2.0):
    """Pure-JAX reference mirroring torch F.cross_entropy + focal weighting."""
    logp = jax.nn.log_softmax(logits.astype(jnp.float32), axis=-1)
    ce = -jnp.take_along_axis(logp, targets[:, None].astype(jnp.int32), axis=-1)[:, 0]
    pt = jnp.exp(-ce)
    focal = alpha * (1.0 - pt) ** gamma * ce
    return focal.mean()


if __name__ == "__main__":
    key = jax.random.PRNGKey(0)
    k1, k2, k3, k4 = jax.random.split(key, 4)

    # Case 1: small classifier batch, single tile, f32 logits, default tiling.
    N1, C1 = 8, 32
    logits1 = jax.random.normal(k1, (N1, C1), dtype=jnp.float32)
    targets1 = jax.random.randint(k2, (N1,), 0, C1, dtype=jnp.int32)
    out1 = jax.block_until_ready(focal_loss(logits1, targets1, alpha=1.0, gamma=2.0))
    ref1 = _focal_loss_ref(logits1, targets1, alpha=1.0, gamma=2.0)
    assert jnp.allclose(out1, ref1, rtol=5e-3, atol=1e-5), (out1, ref1)

    # Case 2: multi-tile path with ragged last tile, 2-way split (uneven, so
    # the clamped/duplicated masked tile is exercised) + bf16 ingest.
    N2, C2 = 37, 16
    logits2 = jax.random.normal(k3, (N2, C2), dtype=jnp.float32).astype(jnp.bfloat16)
    targets2 = jax.random.randint(k4, (N2,), 0, C2, dtype=jnp.int32)
    out2 = jax.block_until_ready(
        focal_loss(logits2, targets2, alpha=0.25, gamma=2.0, tile_n=16)
    )
    ref2 = _focal_loss_ref(logits2.astype(jnp.float32), targets2, alpha=0.25, gamma=2.0)
    assert jnp.allclose(out2, ref2, rtol=5e-3, atol=1e-4), (out2, ref2)

    # Case 3: non-integer gamma exercises the float-pow branch.
    out3 = jax.block_until_ready(focal_loss(logits1, targets1, alpha=0.5, gamma=1.5))
    ref3 = _focal_loss_ref(logits1, targets1, alpha=0.5, gamma=1.5)
    assert jnp.allclose(out3, ref3, rtol=5e-3, atol=1e-5), (out3, ref3)

    print("KERNEL_OK")
</pallas_src>

<mosaic_0001>
module attributes {stable_mosaic.version = 11 : i64} {
  func.func @_focal_loss_kernel(%arg0: i32, %arg1: i32, %arg2: memref<8x32xf32, #tpu.memory_space<vmem>>, %arg3: memref<8x1xi32, #tpu.memory_space<vmem>>, %arg4: memref<1x1xf32, #tpu.memory_space<vmem>>) attributes {dimension_semantics = [#tpu.dimension_semantics<parallel>, #tpu.dimension_semantics<arbitrary>], iteration_bounds = array<i64: 1, 1>, scalar_prefetch = 0 : i64, scratch_operands = 0 : i64, tpu.core_type = #tpu.core_type<tc>, window_params = [{transform_indices = @transform_0, window_bounds = array<i64: 8, 32>}, {transform_indices = @transform_1, window_bounds = array<i64: 8, 1>}, {transform_indices = @transform_2, window_bounds = array<i64: 1, 1>}]} {
    %c0_i32 = arith.constant 0 : i32
    %0 = arith.cmpi eq, %arg1, %c0_i32 : i32
    %1 = arith.extui %0 : i1 to i32
    %c0_i32_0 = arith.constant 0 : i32
    %2 = arith.cmpi ne, %1, %c0_i32_0 : i32
    scf.if %2 {
      %cst_18 = arith.constant 0.000000e+00 : f32
      %50 = vector.broadcast %cst_18 : f32 to vector<1x1xf32>
      %c0_19 = arith.constant 0 : index
      %c0_20 = arith.constant 0 : index
      %51 = vector.load %arg4[%c0_19, %c0_20] : memref<1x1xf32, #tpu.memory_space<vmem>>, vector<1x1xf32>
      tpu.vector_store %arg4[%c0_19, %c0_20], %50 {strides = array<i32>} : memref<1x1xf32, #tpu.memory_space<vmem>>, vector<1x1xf32>,
    } else {
    }
    %c0 = arith.constant 0 : index
    %c0_1 = arith.constant 0 : index
    %3 = vector.load %arg2[%c0, %c0_1] : memref<8x32xf32, #tpu.memory_space<vmem>>, vector<8x32xf32>
    %c0_2 = arith.constant 0 : index
    %c0_3 = arith.constant 0 : index
    %4 = vector.load %arg3[%c0_2, %c0_3] : memref<8x1xi32, #tpu.memory_space<vmem>>, vector<8x1xi32>
    %cst = arith.constant dense<0xFF800000> : vector<8xf32>
    %5 = vector.multi_reduction <maximumf>, %3, %cst [1] : vector<8x32xf32> to vector<8xf32>
    %6 = vector.shape_cast %5 : vector<8xf32> to vector<8x1xf32>
    %7 = vector.broadcast %6 : vector<8x1xf32> to vector<8x32xf32>
    %8 = arith.subf %3, %7 : vector<8x32xf32>
    %9 = math.exp %8 : vector<8x32xf32>
    %cst_4 = arith.constant dense<0.000000e+00> : vector<8xf32>
    %10 = vector.multi_reduction <add>, %9, %cst_4 [1] : vector<8x32xf32> to vector<8xf32>
    %11 = vector.shape_cast %10 : vector<8xf32> to vector<8x1xf32>
    %12 = tpu.iota {dimensions = array<i32: 1>} : vector<8x32xi32>
    %13 = vector.broadcast %4 : vector<8x1xi32> to vector<8x32xi32>
    %14 = arith.cmpi eq, %12, %13 : vector<8x32xi32>
    %cst_5 = arith.constant 0.000000e+00 : f32
    %15 = vector.broadcast %cst_5 : f32 to vector<8x32xf32>
    %16 = arith.select %14, %8, %15 : vector<8x32xi1>, vector<8x32xf32>
    %cst_6 = arith.constant dense<0.000000e+00> : vector<8xf32>
    %17 = vector.multi_reduction <add>, %16, %cst_6 [1] : vector<8x32xf32> to vector<8xf32>
    %18 = vector.shape_cast %17 : vector<8xf32> to vector<8x1xf32>
    %19 = math.log %11 : vector<8x1xf32>
    %20 = arith.subf %19, %18 : vector<8x1xf32>
    %cst_7 = arith.constant 0.000000e+00 : f32
    %21 = vector.broadcast %cst_7 : f32 to vector<8x1xf32>
    %22 = arith.subf %21, %20 : vector<8x1xf32>
    %23 = math.exp %22 : vector<8x1xf32>
    %cst_8 = arith.constant 1.000000e+00 : f32
    %24 = vector.broadcast %cst_8 : f32 to vector<8x1xf32>
    %25 = arith.subf %24, %23 : vector<8x1xf32>
    %cst_9 = arith.constant 0.000000e+00 : f32
    %26 = vector.broadcast %cst_9 : f32 to vector<8x1xf32>
    %27 = arith.maximumf %25, %26 : vector<8x1xf32>
    %28 = arith.mulf %27, %27 : vector<8x1xf32>
    %cst_10 = arith.constant 1.000000e+00 : f32
    %29 = vector.broadcast %cst_10 : f32 to vector<8x1xf32>
    %30 = arith.mulf %29, %28 : vector<8x1xf32>
    %31 = arith.mulf %30, %20 : vector<8x1xf32>
    %c1_i32 = arith.constant 1 : i32
    %32 = arith.muli %arg0, %c1_i32 : i32
    %33 = arith.addi %32, %arg1 : i32
    %34 = tpu.iota {dimensions = array<i32: 0>} : vector<8x1xi32>
    %c8_i32 = arith.constant 8 : i32
    %35 = arith.muli %33, %c8_i32 : i32
    %36 = vector.broadcast %35 : i32 to vector<8x1xi32>
    %37 = arith.addi %34, %36 : vector<8x1xi32>
    %c8_i32_11 = arith.constant 8 : i32
    %38 = vector.broadcast %c8_i32_11 : i32 to vector<8x1xi32>
    %39 = arith.cmpi slt, %37, %38 : vector<8x1xi32>
    %c0_12 = arith.constant 0 : index
    %c0_13 = arith.constant 0 : index
    %40 = vector.load %arg4[%c0_12, %c0_13] : memref<1x1xf32, #tpu.memory_space<vmem>>, vector<1x1xf32>
    %cst_14 = arith.constant 0.000000e+00 : f32
    %41 = vector.broadcast %cst_14 : f32 to vector<8x1xf32>
    %42 = arith.select %39, %31, %41 : vector<8x1xi1>, vector<8x1xf32>
    %43 = vector.shape_cast %42 : vector<8x1xf32> to vector<1x8x1xf32>
    %cst_15 = arith.constant dense<0.000000e+00> : vector<1xf32>
    %44 = vector.multi_reduction <add>, %43, %cst_15 [1, 2] : vector<1x8x1xf32> to vector<1xf32>
    %45 = vector.shape_cast %44 : vector<1xf32> to vector<1x1x1xf32>
    %46 = vector.extract %45[0, 0, 0] : f32 from vector<1x1x1xf32>
    %47 = vector.broadcast %46 : f32 to vector<1x1xf32>
    %48 = arith.addf %40, %47 : vector<1x1xf32>
    %c0_16 = arith.constant 0 : index
    %c0_17 = arith.constant 0 : index
    %49 = vector.load %arg4[%c0_16, %c0_17] : memref<1x1xf32, #tpu.memory_space<vmem>>, vector<1x1xf32>
    tpu.vector_store %arg4[%c0_16, %c0_17], %48 {strides = array<i32>} : memref<1x1xf32, #tpu.memory_space<vmem>>, vector<1x1xf32>,
    return
  }
  func.func @transform_0(%arg0: i32, %arg1: i32) -> (i32, i32) {
    %c1_i32 = arith.constant 1 : i32
    %0 = arith.muli %arg0, %c1_i32 : i32
    %1 = arith.addi %0, %arg1 : i32
    %c0_i32 = arith.constant 0 : i32
    %2 = arith.minsi %1, %c0_i32 : i32
    %c0_i32_0 = arith.constant 0 : i32
    %c0_i32_1 = arith.constant 0 : i32
    return %2, %c0_i32_0 : i32, i32
  }
  func.func @transform_1(%arg0: i32, %arg1: i32) -> (i32, i32) {
    %c1_i32 = arith.constant 1 : i32
    %0 = arith.muli %arg0, %c1_i32 : i32
    %1 = arith.addi %0, %arg1 : i32
    %c0_i32 = arith.constant 0 : i32
    %2 = arith.minsi %1, %c0_i32 : i32
    %c0_i32_0 = arith.constant 0 : i32
    %c0_i32_1 = arith.constant 0 : i32
    return %2, %c0_i32_0 : i32, i32
  }
  func.func @transform_2(%arg0: i32, %arg1: i32) -> (i32, i32) {
    %c0_i32 = arith.constant 0 : i32
    %c0_i32_0 = arith.constant 0 : i32
    return %arg0, %c0_i32 : i32, i32
  }
}

</mosaic_0001>

<llo_original>
// kernel: tpu_custom_call.1
$region0: #{tpu_custom_call.1}
  #allocation0 [shape = 'u32[]', space=smem, size = 0x4, offset = 0x4, fixed_abs, tag = 'smem constant byte address 0x4 - core index']
  #allocation1 [shape = 'u32[72,128]{1,0:T(1,128)}', space=vmem, size = 0x9000, scoped, tag = 'internal scratch']
  %s0 = inlined_call_operand.vmem [shape: f32[8,32], index: 0, kind: input, shape index: {}]
  %s1 = inlined_call_operand.vmem [shape: s32[8,1], index: 1, kind: input, shape index: {}]
  %s2 = inlined_call_operand.hbm [shape: f32[1,1], index: 2, kind: output, shape index: {}]
  %s3 = sld [smem:[#allocation0]]
  $region22: #{tpu_custom_call.1} parent=0
    _
  %s5 = ssub.s32 1, %s3
  %s6 = scalar_select 0, %s5, %s3
  $region1: #{tpu_custom_call.1} parent=0
    #allocation2 [shape = 'u8[512]{0}', space=vmem, size = 0x400, scoped, tag = 'output window, operand 0, single buffered']
    #allocation3 [shape = 's32[1]{0}', space=sflag, size = 0x4, scoped, tag = 'scoped memory for tpu_custom_call.1']
    %7 = vsyncpa [#allocation3], 0
    // Predicated region
    $region2: #{tpu_custom_call.1} parent=1 // pred_check
      _
    $region3: #{tpu_custom_call.1} parent=1 // pred_check_branch
      %9 = sbr.rel (0) target = $region5
    $region4: #{tpu_custom_call.1} parent=1 // pred_region
      %s10 = sadd.s32 0, 0
      %p11 = scmp.lt.s32.totalorder %s10, 0
      %s12 = scalar_select %p11, %s10, 0
      %p13 = scmp.lt.s32.totalorder %s12, 0
      %s14 = scalar_select %p13, %s12, 0
      %s15 = smul.addr %s14, 8
      %s16 = scalar_lea.vmem %s0, %s15
      %s17 = sadd.s32 0, 0
      %p18 = scmp.lt.s32.totalorder %s17, 0
      %s19 = scalar_select %p18, %s17, 0
    $region5: #{tpu_custom_call.1} parent=1 // pred_fallthru
      _
    // Predicated region
    $region6: #{tpu_custom_call.1} parent=1 // pred_check
      _
    $region7: #{tpu_custom_call.1} parent=1 // pred_check_branch
      %21 = sbr.rel (0) target = $region9
    $region8: #{tpu_custom_call.1} parent=1 // pred_region
      %s22 = sadd.s32 0, 0
      %p23 = scmp.lt.s32.totalorder %s22, 0
      %s24 = scalar_select %p23, %s22, 0
      %p25 = scmp.lt.s32.totalorder %s24, 0
      %s26 = scalar_select %p25, %s24, 0
      %s27 = smul.addr %s26, 8
      %s28 = scalar_lea.vmem %s1, %s27
      %s29 = sadd.s32 0, 0
      %p30 = scmp.lt.s32.totalorder %s29, 0
      %s31 = scalar_select %p30, %s29, 0
    $region9: #{tpu_custom_call.1} parent=1 // pred_fallthru
      _
    %s32 = sadd.s32 0, 0
    %p33 = scmp.lt.s32.totalorder %s32, 0
    %s34 = scalar_select %p33, %s32, 0
    %p35 = scmp.lt.s32.totalorder %s34, 0
    %s36 = scalar_select %p35, %s34, 0
    %s37 = smul.addr %s36, 8
    %s38 = scalar_lea.vmem %s0, %s37
    %s39 = sadd.s32 0, 0
    %p40 = scmp.lt.s32.totalorder %s39, 0
    %s41 = scalar_select %p40, %s39, 0
    %p42 = scmp.lt.s32.totalorder %s41, 0
    %s43 = scalar_select %p42, %s41, 0
    %s44 = smul.addr %s43, 8
    %s45 = scalar_lea.vmem %s1, %s44
    %s46 = sadd.s32 0, 0
    %p47 = scmp.lt.s32.totalorder %s46, 0
    %s48 = scalar_select %p47, %s46, 0
    %p49 = scmp.lt.s32.totalorder %s48, 0
    %s50 = scalar_select %p49, %s48, 0
    %s51 = smul.addr %s50, 8
    %s52 = scalar_lea.vmem %s0, %s51
    %s53 = sadd.s32 0, 0
    %p54 = scmp.lt.s32.totalorder %s53, 0
    %s55 = scalar_select %p54, %s53, 0
    %s56 = sadd.s32 0, 0
    %p57 = scmp.lt.s32.totalorder %s56, 0
    %s58 = scalar_select %p57, %s56, 0
    %p59 = scmp.lt.s32.totalorder %s58, 0
    %s60 = scalar_select %p59, %s58, 0
    %s61 = smul.addr %s60, 8
    %s62 = scalar_lea.vmem %s1, %s61
    %s63 = sadd.s32 0, 0
    %p64 = scmp.lt.s32.totalorder %s63, 0
    %s65 = scalar_select %p64, %s63, 0
    %p66 = scmp.eq.s32.totalorder 0, 0
    // Predicated region
    $region10: #{tpu_custom_call.1} parent=1 // pred_check
      %p67 = pneg %p66
    $region11: #{tpu_custom_call.1} parent=1 // pred_check_branch
      %69 = sbr.rel (%p67) target = $region13
    $region12: #{tpu_custom_call.1} parent=1 // pred_region
      %vm70 = vcmask 0
      %71 = vst.msk [vmem:[#allocation2] sm:$0x1] %vm70, 0.0
    $region13: #{tpu_custom_call.1} parent=1 // pred_fallthru
      _
    %v72 = vld [vmem:[%s52] sm:$0xff]
    %v73 = vld [vmem:[%s62] sm:$0xff]
    %vm74 = vcmask 261120
    %v75 = vsel %vm74, %v72, -inf
    %76 = vmax.xlane.f32.xlu0 %v75
    %v77 = vpop.xlane.xlu0 %76
    %v78 = vsub.f32 %v72, %v77
    %v79 = vmul.f32 %v78, 1.442695
    %v80 = vpow.pop %v79
    %v81 = vsel %vm74, %v80, 0.0
    %82 = vadd.xlane.f32.xlu0 %v81
    %v83 = vpop.xlane.xlu0 %82
    %v84 = vlaneseq
    %v85 = vand.u32 %v84, 127
    %86 = vset.pattern.permute.xlu0 0
    %87 = vperm.xlu0 %86, %v73
    %v88 = vpop.permute.xlu0 %87
    %vm89 = vcmp.eq.s32.totalorder %v85, %v88
    %v90 = vsel %vm89, %v78, 0.0
    %v91 = vsel %vm74, %v90, 0.0
    %92 = vadd.xlane.f32.xlu0 %v91
    %v93 = vpop.xlane.xlu0 %92
    %v94 = vlog2.pop %v83
    %v95 = vmul.f32 %v94, 0.6931472
    %v96 = vsub.f32 %v95, %v93
    %v97 = vsub.f32 0.0, %v96
    %v98 = vmul.f32 %v97, 1.442695
    %v99 = vpow.pop %v98
    %v100 = vsub.f32 1.0, %v99
    %v101 = vmax.f32 %v100, 0.0
    %v102 = vmul.f32 %v101, %v101
    %v103 = vmul.f32 %v102, %v96
    %s104 = sadd.s32 0, 0
    %v105 = vlaneseq
    %v106 = vshrl.u32 %v105, 7
    %s107 = smul.u32 %s104, 8
    %v108 = vstv %s107
    %v109 = vadd.s32 %v106, %v108
    %vm110 = vcmp.lt.s32.totalorder %v109, 8
    %v111 = vld [vmem:[#allocation2] sm:$0x1]
    %v112 = vsel %vm110, %v103, 0.0
    %vm113 = vcmask 7168
    %v114 = vsel %vm113, %v112, 0.0
    %115 = vadd.xlane.f32.xlu0 %v114
    %v116 = vpop.xlane.xlu0 %115
    %v117 = vrot.slane %v116, 4
    %v118 = vadd.f32 %v116, %v117
    %v119 = vrot.slane %v118, 2
    %v120 = vadd.f32 %v118, %v119
    %v121 = vrot.slane %v120, 1
    %v122 = vadd.f32 %v120, %v121
    %s123 = vtos %v122
    %v124 = vstv %s123
    %v125 = vadd.f32 %v111, %v124
    %vm126 = vcmask 0
    %127 = vst.msk [vmem:[#allocation2] sm:$0x1] %vm126, %v125
    // Predicated region
    $region14: #{tpu_custom_call.1} parent=1 // pred_check
      _
    $region15: #{tpu_custom_call.1} parent=1 // pred_check_branch
      %129 = sbr.rel (0) target = $region17
    $region16: #{tpu_custom_call.1} parent=1 // pred_region
      %131 = vsyncadd [#allocation3], 0
      %s133 = sshll.u32 [#allocation2], 4
      %s134 = int_to_ptr.vmem [resolvable:$true] %s133
      %s135 = sshll.u32 %s2, 4
      %s136 = int_to_ptr.hbm [resolvable:$true] %s135
      %138 = dma.vmem_to_hbm [thread:$0]  %s134, 16, %s136, [#allocation3]
    $region17: #{tpu_custom_call.1} parent=1 // pred_fallthru
      _
    // Predicated region
    $region18: #{tpu_custom_call.1} parent=1 // pred_check
      _
    $region19: #{tpu_custom_call.1} parent=1 // pred_check_branch
      %140 = sbr.rel (0) target = $region21
    $region20: #{tpu_custom_call.1} parent=1 // pred_region
      %142 = dma.done [#allocation3], 16
    $region21: #{tpu_custom_call.1} parent=1 // pred_fallthru
      _
    %143 = vsyncpa [#allocation3], 1

</llo_original>
